<compile_context>
chip_gen: v5e
topology: v5e:2x2
jax: 0.10.0
libtpu: 0.0.40
codegen_flags: <defaults>
</compile_context>

<pallas_src>
import functools

import jax
import jax.numpy as jnp
from jax import lax
from jax.experimental import pallas as pl
from jax.experimental.pallas import tpu as pltpu


def basic_block_kernel(x_ref, ct1_ref, ct2_ref, sw_ref, c1_ref, c2_ref, out_ref,
                       *, rows_per_image):
    M = out_ref.shape[0]          # rows in this block = images_per_step * H
    wco = out_ref.shape[1]        # W * Cout (lane-dense)

    x = x_ref[...]                # (M, W*Cin)

    bn1s = c1_ref[0:1, :]                         # bn1 scale
    bn1b = c1_ref[1:2, :]                         # bn1 shift
    bn2s = c2_ref[0:1, :]                         # bn2 scale
    bn2b = c2_ref[1:2, :]                         # bn2 shift with conv1 bias folded in
    bfin = c2_ref[2:3, :]                         # conv2 bias + shortcut bias

    # Per-image row index -> boundary masks for the vertical (dy) taps.
    row = lax.broadcasted_iota(jnp.int32, (M, 1), 0)
    rin = row % rows_per_image
    not_first = rin != 0
    not_last = rin != (rows_per_image - 1)

    def conv3x3(a, ctw):
        # One MXU matmul folds all horizontal taps + SAME zero padding along W.
        p = jnp.dot(a, ctw, preferred_element_type=jnp.float32)   # (M, 3*wco)
        p0 = p[:, :wco]             # dy = 0 tap: out[h] += p0[h-1]
        p1 = p[:, wco:2 * wco]      # dy = 1 tap: aligned
        p2 = p[:, 2 * wco:]         # dy = 2 tap: out[h] += p2[h+1]
        # Vertical taps via XLU sublane roll + VPU mask (no extra matmuls);
        # the mask also zeroes rows that would leak across image boundaries.
        d = jnp.where(not_first, pltpu.roll(p0, shift=1, axis=0), 0.0)
        u = jnp.where(not_last, pltpu.roll(p2, shift=M - 1, axis=0), 0.0)
        return d + p1 + u

    # --- BN1 (eval, folded) + ReLU ---
    a = jnp.maximum(x * bn1s + bn1b, 0.0)

    # --- conv1 (bias folded into bn2 shift) -> BN2 (eval) -> ReLU ---
    # dropout: identity in eval mode.
    # TODO(synk): training-mode dropout (Bernoulli mask + 1/(1-p) scaling) not implemented.
    b = jnp.maximum(conv3x3(a, ct1_ref[...]) * bn2s + bn2b, 0.0)

    # --- conv2 + 1x1 shortcut + combined biases; lane-dense unmasked store ---
    out_ref[...] = (conv3x3(b, ct2_ref[...])
                    + jnp.dot(x, sw_ref[...], preferred_element_type=jnp.float32)
                    + bfin)


def _toeplitz_conv_weights(w_oihw, W):
    """Expand a 3x3 OIHW conv weight into (W*Cin, 3*W*Cout).

    For each vertical tap dy, T_dy[(wi*Cin+ci), (wo*Cout+co)] = w[dy, wi-wo+1, ci, co]
    when the horizontal tap is in range (out-of-range taps dropped = SAME zero padding
    along W).  The three dy blocks are concatenated along columns.
    TODO(synk): at real WideResNet widths (W=32, channels>=160) this is band-sparse and
    W^2-scaling; switch to a K=9*Cin im2col formulation / column-tiled grid axis there.
    """
    w = jnp.transpose(w_oihw, (2, 3, 1, 0))               # OIHW -> HWIO (3,3,Cin,Cout)
    kh, kw, ci, co = w.shape
    wi = jnp.arange(W)[:, None]
    wo = jnp.arange(W)[None, :]
    dx = wi - wo + 1                                      # horizontal tap feeding wi -> wo
    valid = ((dx >= 0) & (dx < kw)).astype(w.dtype)[:, :, None, None]
    dx_c = jnp.clip(dx, 0, kw - 1)
    blocks = []
    for d in range(kh):
        g = w[d][dx_c] * valid                            # (W, W, Cin, Cout)
        blocks.append(jnp.transpose(g, (0, 2, 1, 3)).reshape(W * ci, W * co))
    return jnp.concatenate(blocks, axis=1)                # (W*Cin, 3*W*Cout)


def _blockdiag_1x1_weight(ws_oihw, W):
    """1x1 conv weight (Cout, Cin, 1, 1) -> block-diagonal (W*Cin, W*Cout)."""
    ws = jnp.transpose(ws_oihw[:, :, 0, 0], (1, 0))       # (Cin, Cout)
    ci, co = ws.shape
    s4 = jnp.eye(W, dtype=ws.dtype)[:, None, :, None] * ws[None, :, None, :]
    return s4.reshape(W * ci, W * co)


def basic_block_wide(x_nchw, p, eps=1e-5, grid_steps=1):
    """JAX wrapper: one-time weight expansion + layout glue around one fused kernel.

    grid_steps: number of (parallel) grid steps the batch is split into.
      1 (default) = whole batch in one step -> max M for the MXU (best v5e/v6e).
      On v7x use grid_steps=2 (when N allows) so both TensorCores get work.
    """
    N, Cin, H, W = x_nchw.shape
    planes = p["w1"].shape[0]
    wci, wco = W * Cin, W * planes
    assert N % grid_steps == 0, "grid_steps must divide the batch size"
    rows_per_step = (N // grid_steps) * H

    # NCHW -> lane-dense rows (N*H, W*Cin): lane index = w*Cin + ci.
    # TODO(synk): if the surrounding model can hand over NHWC, drop this transpose.
    x_rows = jnp.transpose(x_nchw, (0, 2, 3, 1)).reshape(N * H, wci)

    ct1 = _toeplitz_conv_weights(p["w1"], W)              # (W*Cin,    3*W*planes)
    ct2 = _toeplitz_conv_weights(p["w2"], W)              # (W*planes, 3*W*planes)
    sw = _blockdiag_1x1_weight(p["ws"], W)                # (W*Cin,    W*planes)

    # Fold eval-mode BN into per-channel scale/shift (tiled across W so they
    # broadcast directly against lane-dense rows), fold conv1 bias into the bn2
    # shift, and pre-sum conv2 + shortcut biases.  Two consolidated inputs.
    inv1 = p["bn1_gamma"] / jnp.sqrt(p["bn1_var"] + eps)
    c1 = jnp.stack([jnp.tile(inv1, W),
                    jnp.tile(p["bn1_beta"] - p["bn1_mean"] * inv1, W)], axis=0)   # (2, wci)

    inv2 = p["bn2_gamma"] / jnp.sqrt(p["bn2_var"] + eps)
    c2 = jnp.stack([jnp.tile(inv2, W),
                    jnp.tile(p["bn2_beta"] + (p["b1"] - p["bn2_mean"]) * inv2, W),
                    jnp.tile(p["b2"] + p["bs"], W)], axis=0)                       # (3, wco)

    kernel = functools.partial(basic_block_kernel, rows_per_image=H)

    out_rows = pl.pallas_call(
        kernel,
        out_shape=jax.ShapeDtypeStruct((N * H, wco), jnp.float32),
        grid_spec=pltpu.PrefetchScalarGridSpec(
            num_scalar_prefetch=0,
            grid=(grid_steps,),
            in_specs=[
                pl.BlockSpec((rows_per_step, wci), lambda s: (s, 0)),   # activations
                pl.BlockSpec((wci, 3 * wco), lambda s: (0, 0)),         # conv1 Toeplitz
                pl.BlockSpec((wco, 3 * wco), lambda s: (0, 0)),         # conv2 Toeplitz
                pl.BlockSpec((wci, wco), lambda s: (0, 0)),             # shortcut 1x1
                pl.BlockSpec((2, wci), lambda s: (0, 0)),               # bn1 scale/shift
                pl.BlockSpec((3, wco), lambda s: (0, 0)),               # bn2 scale/shift' + bias
            ],
            out_specs=pl.BlockSpec((rows_per_step, wco), lambda s: (s, 0)),
        ),
        compiler_params=pltpu.CompilerParams(
            dimension_semantics=("parallel",),
            vmem_limit_bytes=32 * 1024 * 1024,
        ),
    )(x_rows, ct1, ct2, sw, c1, c2)

    out = out_rows.reshape(N, H, W, planes)
    return jnp.transpose(out, (0, 3, 1, 2))               # NHWC -> NCHW


def reference_nchw(x, p, eps=1e-5):
    """Pure-JAX reference with the same (eval-mode) semantics as the PyTorch module."""
    def bn(z, g, b, m, v):
        inv = g / jnp.sqrt(v + eps)
        return z * inv[None, :, None, None] + (b - m * inv)[None, :, None, None]

    dn = ("NCHW", "OIHW", "NCHW")
    a = jax.nn.relu(bn(x, p["bn1_gamma"], p["bn1_beta"], p["bn1_mean"], p["bn1_var"]))
    o1 = lax.conv_general_dilated(a, p["w1"], (1, 1), "SAME",
                                  dimension_numbers=dn) + p["b1"][None, :, None, None]
    b_ = jax.nn.relu(bn(o1, p["bn2_gamma"], p["bn2_beta"], p["bn2_mean"], p["bn2_var"]))
    o2 = lax.conv_general_dilated(b_, p["w2"], (1, 1), "SAME",
                                  dimension_numbers=dn) + p["b2"][None, :, None, None]
    sc = lax.conv_general_dilated(x, p["ws"], (1, 1), "SAME",
                                  dimension_numbers=dn) + p["bs"][None, :, None, None]
    return o2 + sc


if __name__ == "__main__":
    # Config: in_planes=4, planes=8, stride=1, dropout_rate (eval -> identity).
    N, Cin, H, W = 2, 4, 16, 16
    planes = 8

    key = jax.random.PRNGKey(0)
    ks = jax.random.split(key, 16)
    x = jax.random.normal(ks[0], (N, Cin, H, W), jnp.float32)

    p = {
        "bn1_gamma": jax.random.uniform(ks[1], (Cin,), minval=0.5, maxval=1.5),
        "bn1_beta":  jax.random.normal(ks[2], (Cin,)) * 0.1,
        "bn1_mean":  jax.random.normal(ks[3], (Cin,)) * 0.1,
        "bn1_var":   jax.random.uniform(ks[4], (Cin,), minval=0.5, maxval=1.5),
        "w1": jax.random.normal(ks[5], (planes, Cin, 3, 3)) * 0.1,
        "b1": jax.random.normal(ks[6], (planes,)) * 0.1,
        "bn2_gamma": jax.random.uniform(ks[7], (planes,), minval=0.5, maxval=1.5),
        "bn2_beta":  jax.random.normal(ks[8], (planes,)) * 0.1,
        "bn2_mean":  jax.random.normal(ks[9], (planes,)) * 0.1,
        "bn2_var":   jax.random.uniform(ks[10], (planes,), minval=0.5, maxval=1.5),
        "w2": jax.random.normal(ks[11], (planes, planes, 3, 3)) * 0.1,
        "b2": jax.random.normal(ks[12], (planes,)) * 0.1,
        "ws": jax.random.normal(ks[13], (planes, Cin, 1, 1)) * 0.1,
        "bs": jax.random.normal(ks[14], (planes,)) * 0.1,
    }
    p = {k: v.astype(jnp.float32) for k, v in p.items()}

    out = basic_block_wide(x, p)           # whole batch in one grid step
    out = jax.block_until_ready(out)

    ref = reference_nchw(x, p)
    assert out.shape == (N, planes, H, W)
    assert jnp.allclose(out, ref, rtol=1e-3, atol=1e-3), "mismatch vs pure-JAX reference"

    print("KERNEL_OK")
</pallas_src>

<mosaic_0001>
module attributes {stable_mosaic.version = 11 : i64} {
  func.func @basic_block_kernel(%arg0: i32, %arg1: memref<32x64xf32, #tpu.memory_space<vmem>>, %arg2: memref<64x384xf32, #tpu.memory_space<vmem>>, %arg3: memref<128x384xf32, #tpu.memory_space<vmem>>, %arg4: memref<64x128xf32, #tpu.memory_space<vmem>>, %arg5: memref<2x64xf32, #tpu.memory_space<vmem>>, %arg6: memref<3x128xf32, #tpu.memory_space<vmem>>, %arg7: memref<32x128xf32, #tpu.memory_space<vmem>>) attributes {dimension_semantics = [#tpu.dimension_semantics<parallel>], iteration_bounds = array<i64: 1>, scalar_prefetch = 0 : i64, scratch_operands = 0 : i64, tpu.core_type = #tpu.core_type<tc>, window_params = [{transform_indices = @transform_0, window_bounds = array<i64: 32, 64>}, {pipeline_mode = #tpu.pipeline_mode<synchronous>, transform_indices = @transform_1, window_bounds = array<i64: 64, 384>}, {pipeline_mode = #tpu.pipeline_mode<synchronous>, transform_indices = @transform_2, window_bounds = array<i64: 128, 384>}, {pipeline_mode = #tpu.pipeline_mode<synchronous>, transform_indices = @transform_3, window_bounds = array<i64: 64, 128>}, {pipeline_mode = #tpu.pipeline_mode<synchronous>, transform_indices = @transform_4, window_bounds = array<i64: 2, 64>}, {pipeline_mode = #tpu.pipeline_mode<synchronous>, transform_indices = @transform_5, window_bounds = array<i64: 3, 128>}, {transform_indices = @transform_6, window_bounds = array<i64: 32, 128>}]} {
    %c0 = arith.constant 0 : index
    %c0_0 = arith.constant 0 : index
    %0 = vector.load %arg1[%c0, %c0_0] : memref<32x64xf32, #tpu.memory_space<vmem>>, vector<32x64xf32>
    %c0_1 = arith.constant 0 : index
    %c0_2 = arith.constant 0 : index
    %1 = vector.load %arg5[%c0_1, %c0_2] : memref<2x64xf32, #tpu.memory_space<vmem>>, vector<1x64xf32>
    %c1 = arith.constant 1 : index
    %c0_3 = arith.constant 0 : index
    %2 = vector.load %arg5[%c1, %c0_3] : memref<2x64xf32, #tpu.memory_space<vmem>>, vector<1x64xf32>
    %c0_4 = arith.constant 0 : index
    %c0_5 = arith.constant 0 : index
    %3 = vector.load %arg6[%c0_4, %c0_5] : memref<3x128xf32, #tpu.memory_space<vmem>>, vector<1x128xf32>
    %c1_6 = arith.constant 1 : index
    %c0_7 = arith.constant 0 : index
    %4 = vector.load %arg6[%c1_6, %c0_7] : memref<3x128xf32, #tpu.memory_space<vmem>>, vector<1x128xf32>
    %c2 = arith.constant 2 : index
    %c0_8 = arith.constant 0 : index
    %5 = vector.load %arg6[%c2, %c0_8] : memref<3x128xf32, #tpu.memory_space<vmem>>, vector<1x128xf32>
    %6 = tpu.iota {dimensions = array<i32: 0>} : vector<32x1xi32>
    %c16_i32 = arith.constant 16 : i32
    %c0_i32 = arith.constant 0 : i32
    %7 = arith.cmpi eq, %c16_i32, %c0_i32 : i32
    %c1_i32 = arith.constant 1 : i32
    %8 = arith.select %7, %c1_i32, %c16_i32 : i32
    %9 = vector.broadcast %8 : i32 to vector<32x1xi32>
    %10 = arith.remsi %6, %9 : vector<32x1xi32>
    %c0_i32_9 = arith.constant 0 : i32
    %11 = vector.broadcast %c0_i32_9 : i32 to vector<32x1xi32>
    %12 = arith.cmpi ne, %10, %11 : vector<32x1xi32>
    %c0_i32_10 = arith.constant 0 : i32
    %13 = vector.broadcast %c0_i32_10 : i32 to vector<32x1xi32>
    %14 = arith.cmpi slt, %10, %13 : vector<32x1xi32>
    %c0_i32_11 = arith.constant 0 : i32
    %15 = arith.cmpi slt, %8, %c0_i32_11 : i32
    %16 = vector.broadcast %15 : i1 to vector<32x1xi1>
    %17 = vector.broadcast %16 : vector<32x1xi1> to vector<32x1xi1>
    %18 = arith.xori %14, %17 : vector<32x1xi1>
    %19 = arith.andi %18, %12 : vector<32x1xi1>
    %20 = vector.broadcast %8 : i32 to vector<32x1xi32>
    %21 = arith.addi %10, %20 : vector<32x1xi32>
    %22 = arith.select %19, %21, %10 : vector<32x1xi1>, vector<32x1xi32>
    %c0_i32_12 = arith.constant 0 : i32
    %23 = vector.broadcast %c0_i32_12 : i32 to vector<32x1xi32>
    %24 = arith.cmpi ne, %22, %23 : vector<32x1xi32>
    %c15_i32 = arith.constant 15 : i32
    %25 = vector.broadcast %c15_i32 : i32 to vector<32x1xi32>
    %26 = arith.cmpi ne, %22, %25 : vector<32x1xi32>
    %27 = vector.broadcast %1 : vector<1x64xf32> to vector<32x64xf32>
    %28 = arith.mulf %0, %27 : vector<32x64xf32>
    %29 = vector.broadcast %2 : vector<1x64xf32> to vector<32x64xf32>
    %30 = arith.addf %28, %29 : vector<32x64xf32>
    %cst = arith.constant 0.000000e+00 : f32
    %31 = vector.broadcast %cst : f32 to vector<32x64xf32>
    %32 = arith.maximumf %30, %31 : vector<32x64xf32>
    %c0_13 = arith.constant 0 : index
    %c0_14 = arith.constant 0 : index
    %33 = vector.load %arg2[%c0_13, %c0_14] : memref<64x384xf32, #tpu.memory_space<vmem>>, vector<64x384xf32>
    %cst_15 = arith.constant dense<0.000000e+00> : vector<32x384xf32>
    %34 = tpu.matmul %32, %33, %cst_15 {dimension_numbers = #tpu.dot_dimension_numbers<[1], [0], [0], [1], [0, 0, 1, 1], [], []>} : vector<32x64xf32>, vector<64x384xf32>, vector<32x384xf32> -> vector<32x384xf32>
    %35 = vector.extract_strided_slice %34 {offsets = [0, 0], sizes = [32, 128], strides = [1, 1]} : vector<32x384xf32> to vector<32x128xf32>
    %36 = vector.extract_strided_slice %34 {offsets = [0, 128], sizes = [32, 128], strides = [1, 1]} : vector<32x384xf32> to vector<32x128xf32>
    %37 = vector.extract_strided_slice %34 {offsets = [0, 256], sizes = [32, 128], strides = [1, 1]} : vector<32x384xf32> to vector<32x128xf32>
    %c1_i32_16 = arith.constant 1 : i32
    %38 = tpu.dynamic_rotate %35 by %c1_i32_16 dim 0 : vector<32x128xf32>, i32 -> vector<32x128xf32>
    %cst_17 = arith.constant 0.000000e+00 : f32
    %39 = vector.shape_cast %24 : vector<32x1xi1> to vector<32x1xi1>
    %40 = vector.broadcast %39 : vector<32x1xi1> to vector<32x128xi1>
    %41 = vector.broadcast %cst_17 : f32 to vector<32x128xf32>
    %42 = arith.select %40, %38, %41 : vector<32x128xi1>, vector<32x128xf32>
    %c31_i32 = arith.constant 31 : i32
    %43 = tpu.dynamic_rotate %37 by %c31_i32 dim 0 : vector<32x128xf32>, i32 -> vector<32x128xf32>
    %cst_18 = arith.constant 0.000000e+00 : f32
    %44 = vector.shape_cast %26 : vector<32x1xi1> to vector<32x1xi1>
    %45 = vector.broadcast %44 : vector<32x1xi1> to vector<32x128xi1>
    %46 = vector.broadcast %cst_18 : f32 to vector<32x128xf32>
    %47 = arith.select %45, %43, %46 : vector<32x128xi1>, vector<32x128xf32>
    %48 = arith.addf %42, %36 : vector<32x128xf32>
    %49 = arith.addf %48, %47 : vector<32x128xf32>
    %50 = vector.broadcast %3 : vector<1x128xf32> to vector<32x128xf32>
    %51 = arith.mulf %49, %50 : vector<32x128xf32>
    %52 = vector.broadcast %4 : vector<1x128xf32> to vector<32x128xf32>
    %53 = arith.addf %51, %52 : vector<32x128xf32>
    %cst_19 = arith.constant 0.000000e+00 : f32
    %54 = vector.broadcast %cst_19 : f32 to vector<32x128xf32>
    %55 = arith.maximumf %53, %54 : vector<32x128xf32>
    %c0_20 = arith.constant 0 : index
    %c0_21 = arith.constant 0 : index
    %56 = vector.load %arg3[%c0_20, %c0_21] : memref<128x384xf32, #tpu.memory_space<vmem>>, vector<128x384xf32>
    %cst_22 = arith.constant dense<0.000000e+00> : vector<32x384xf32>
    %57 = tpu.matmul %55, %56, %cst_22 {dimension_numbers = #tpu.dot_dimension_numbers<[1], [0], [0], [1], [0, 0, 1, 1], [], []>} : vector<32x128xf32>, vector<128x384xf32>, vector<32x384xf32> -> vector<32x384xf32>
    %58 = vector.extract_strided_slice %57 {offsets = [0, 0], sizes = [32, 128], strides = [1, 1]} : vector<32x384xf32> to vector<32x128xf32>
    %59 = vector.extract_strided_slice %57 {offsets = [0, 128], sizes = [32, 128], strides = [1, 1]} : vector<32x384xf32> to vector<32x128xf32>
    %60 = vector.extract_strided_slice %57 {offsets = [0, 256], sizes = [32, 128], strides = [1, 1]} : vector<32x384xf32> to vector<32x128xf32>
    %c1_i32_23 = arith.constant 1 : i32
    %61 = tpu.dynamic_rotate %58 by %c1_i32_23 dim 0 : vector<32x128xf32>, i32 -> vector<32x128xf32>
    %cst_24 = arith.constant 0.000000e+00 : f32
    %62 = vector.shape_cast %24 : vector<32x1xi1> to vector<32x1xi1>
    %63 = vector.broadcast %62 : vector<32x1xi1> to vector<32x128xi1>
    %64 = vector.broadcast %cst_24 : f32 to vector<32x128xf32>
    %65 = arith.select %63, %61, %64 : vector<32x128xi1>, vector<32x128xf32>
    %c31_i32_25 = arith.constant 31 : i32
    %66 = tpu.dynamic_rotate %60 by %c31_i32_25 dim 0 : vector<32x128xf32>, i32 -> vector<32x128xf32>
    %cst_26 = arith.constant 0.000000e+00 : f32
    %67 = vector.shape_cast %26 : vector<32x1xi1> to vector<32x1xi1>
    %68 = vector.broadcast %67 : vector<32x1xi1> to vector<32x128xi1>
    %69 = vector.broadcast %cst_26 : f32 to vector<32x128xf32>
    %70 = arith.select %68, %66, %69 : vector<32x128xi1>, vector<32x128xf32>
    %71 = arith.addf %65, %59 : vector<32x128xf32>
    %72 = arith.addf %71, %70 : vector<32x128xf32>
    %c0_27 = arith.constant 0 : index
    %c0_28 = arith.constant 0 : index
    %73 = vector.load %arg4[%c0_27, %c0_28] : memref<64x128xf32, #tpu.memory_space<vmem>>, vector<64x128xf32>
    %cst_29 = arith.constant dense<0.000000e+00> : vector<32x128xf32>
    %74 = tpu.matmul %0, %73, %cst_29 {dimension_numbers = #tpu.dot_dimension_numbers<[1], [0], [0], [1], [0, 0, 1, 1], [], []>} : vector<32x64xf32>, vector<64x128xf32>, vector<32x128xf32> -> vector<32x128xf32>
    %75 = arith.addf %72, %74 : vector<32x128xf32>
    %76 = vector.broadcast %5 : vector<1x128xf32> to vector<32x128xf32>
    %77 = arith.addf %75, %76 : vector<32x128xf32>
    %c0_30 = arith.constant 0 : index
    %c0_31 = arith.constant 0 : index
    %78 = vector.load %arg7[%c0_30, %c0_31] : memref<32x128xf32, #tpu.memory_space<vmem>>, vector<32x128xf32>
    tpu.vector_store %arg7[%c0_30, %c0_31], %77 {strides = array<i32>} : memref<32x128xf32, #tpu.memory_space<vmem>>, vector<32x128xf32>,
    return
  }
  func.func @transform_0(%arg0: i32) -> (i32, i32) {
    %c0_i32 = arith.constant 0 : i32
    %c0_i32_0 = arith.constant 0 : i32
    return %arg0, %c0_i32 : i32, i32
  }
  func.func @transform_1(%arg0: i32) -> (i32, i32) {
    %c0_i32 = arith.constant 0 : i32
    %c0_i32_0 = arith.constant 0 : i32
    %c0_i32_1 = arith.constant 0 : i32
    return %c0_i32, %c0_i32_0 : i32, i32
  }
  func.func @transform_2(%arg0: i32) -> (i32, i32) {
    %c0_i32 = arith.constant 0 : i32
    %c0_i32_0 = arith.constant 0 : i32
    %c0_i32_1 = arith.constant 0 : i32
    return %c0_i32, %c0_i32_0 : i32, i32
  }
  func.func @transform_3(%arg0: i32) -> (i32, i32) {
    %c0_i32 = arith.constant 0 : i32
    %c0_i32_0 = arith.constant 0 : i32
    %c0_i32_1 = arith.constant 0 : i32
    return %c0_i32, %c0_i32_0 : i32, i32
  }
  func.func @transform_4(%arg0: i32) -> (i32, i32) {
    %c0_i32 = arith.constant 0 : i32
    %c0_i32_0 = arith.constant 0 : i32
    %c0_i32_1 = arith.constant 0 : i32
    return %c0_i32, %c0_i32_0 : i32, i32
  }
  func.func @transform_5(%arg0: i32) -> (i32, i32) {
    %c0_i32 = arith.constant 0 : i32
    %c0_i32_0 = arith.constant 0 : i32
    %c0_i32_1 = arith.constant 0 : i32
    return %c0_i32, %c0_i32_0 : i32, i32
  }
  func.func @transform_6(%arg0: i32) -> (i32, i32) {
    %c0_i32 = arith.constant 0 : i32
    %c0_i32_0 = arith.constant 0 : i32
    return %arg0, %c0_i32 : i32, i32
  }
}

</mosaic_0001>

<llo_original>
// kernel: tpu_custom_call.1
$region0: #{tpu_custom_call.1}
  #allocation0 [shape = 'u32[]', space=smem, size = 0x4, offset = 0x4, fixed_abs, tag = 'smem constant byte address 0x4 - core index']
  #allocation1 [shape = 'u32[72,128]{1,0:T(1,128)}', space=vmem, size = 0x9000, scoped, tag = 'internal scratch']
  %s0 = inlined_call_operand.hbm [shape: f32[32,64], index: 0, kind: input, shape index: {}]
  %s1 = inlined_call_operand.hbm [shape: f32[64,384], index: 1, kind: input, shape index: {}]
  %s2 = inlined_call_operand.hbm [shape: f32[128,384], index: 2, kind: input, shape index: {}]
  %s3 = inlined_call_operand.hbm [shape: f32[64,128], index: 3, kind: input, shape index: {}]
  %s4 = inlined_call_operand.hbm [shape: f32[2,64], index: 4, kind: input, shape index: {}]
  %s5 = inlined_call_operand.vmem [shape: f32[3,128], index: 5, kind: input, shape index: {}]
  %s6 = inlined_call_operand.hbm [shape: f32[32,128], index: 6, kind: output, shape index: {}]
  %s7 = sld [smem:[#allocation0]]
  $region54: #{tpu_custom_call.1} parent=0
    _
  %s9 = ssub.s32 1, %s7
  %s10 = scalar_select 0, %s9, %s7
  $region1: #{tpu_custom_call.1} parent=0
    #allocation2 [shape = 'u8[16384]{0}', space=vmem, size = 0x4000, scoped, tag = 'input window, operand 0, single buffered']
    #allocation3 [shape = 's32[1]{0}', space=sflag, size = 0x4, scoped, tag = 'scoped memory for tpu_custom_call.1']
    #allocation4 [shape = 's32[1]{0}', space=sflag, size = 0x4, scoped, tag = 'scoped memory for tpu_custom_call.1']
    #allocation5 [shape = 'u8[98304]{0}', space=vmem, size = 0x18000, scoped, tag = 'input window, operand 1, single buffered']
    #allocation6 [shape = 's32[1]{0}', space=sflag, size = 0x4, scoped, tag = 'scoped memory for tpu_custom_call.1']
    #allocation7 [shape = 'u8[196608]{0}', space=vmem, size = 0x30000, scoped, tag = 'input window, operand 2, single buffered']
    #allocation8 [shape = 'u8[32768]{0}', space=vmem, size = 0x8000, scoped, tag = 'input window, operand 3, single buffered']
    #allocation9 [shape = 's32[1]{0}', space=sflag, size = 0x4, scoped, tag = 'scoped memory for tpu_custom_call.1']
    #allocation10 [shape = 'u8[1024]{0}', space=vmem, size = 0x400, scoped, tag = 'input window, operand 4, single buffered']
    #allocation11 [shape = 'u8[16384]{0}', space=vmem, size = 0x4000, scoped, tag = 'output window, operand 0, single buffered']
    %11 = vsyncpa [#allocation3], 0
    %12 = vsyncpa [#allocation6], 0
    %13 = vsyncpa [#allocation9], 0
    %14 = vsyncpa [#allocation4], 0
    // Predicated region
    $region2: #{tpu_custom_call.1} parent=1 // pred_check
      _
    $region3: #{tpu_custom_call.1} parent=1 // pred_check_branch
      %16 = sbr.rel (0) target = $region5
    $region4: #{tpu_custom_call.1} parent=1 // pred_region
      %18 = vsyncadd [#allocation3], 0
      %s19 = sshll.u32 %s0, 4
      %s20 = int_to_ptr.hbm [resolvable:$true] %s19
      %s21 = sshll.u32 [#allocation2], 4
      %s22 = int_to_ptr.vmem [resolvable:$true] %s21
      %27 = dma.hbm_to_vmem [thread:$0]  %s20, 512, %s22, [#allocation3], 128, 128, 8
    $region5: #{tpu_custom_call.1} parent=1 // pred_fallthru
      _
    // Predicated region
    $region6: #{tpu_custom_call.1} parent=1 // pred_check
      _
    $region7: #{tpu_custom_call.1} parent=1 // pred_check_branch
      %29 = sbr.rel (0) target = $region9
    $region8: #{tpu_custom_call.1} parent=1 // pred_region
      %31 = vsyncadd [#allocation6], 0
      %s32 = sshll.u32 %s1, 4
      %s33 = int_to_ptr.hbm [resolvable:$true] %s32
      %s34 = sshll.u32 [#allocation5], 4
      %s35 = int_to_ptr.vmem [resolvable:$true] %s34
      %40 = dma.hbm_to_vmem [thread:$0]  %s33, 3072, %s35, [#allocation6], 384, 384, 24
    $region9: #{tpu_custom_call.1} parent=1 // pred_fallthru
      _
    // Predicated region
    $region10: #{tpu_custom_call.1} parent=1 // pred_check
      _
    $region11: #{tpu_custom_call.1} parent=1 // pred_check_branch
      %42 = sbr.rel (0) target = $region13
    $region12: #{tpu_custom_call.1} parent=1 // pred_region
      %44 = vsyncadd [#allocation6], 0
      %s45 = sshll.u32 %s2, 4
      %s46 = int_to_ptr.hbm [resolvable:$true] %s45
      %s47 = sshll.u32 [#allocation7], 4
      %s48 = int_to_ptr.vmem [resolvable:$true] %s47
      %53 = dma.hbm_to_vmem [thread:$0]  %s46, 6144, %s48, [#allocation6], 384, 384, 24
    $region13: #{tpu_custom_call.1} parent=1 // pred_fallthru
      _
    // Predicated region
    $region14: #{tpu_custom_call.1} parent=1 // pred_check
      _
    $region15: #{tpu_custom_call.1} parent=1 // pred_check_branch
      %55 = sbr.rel (0) target = $region17
    $region16: #{tpu_custom_call.1} parent=1 // pred_region
      %57 = vsyncadd [#allocation9], 0
      %s58 = sshll.u32 %s3, 4
      %s59 = int_to_ptr.hbm [resolvable:$true] %s58
      %s60 = sshll.u32 [#allocation8], 4
      %s61 = int_to_ptr.vmem [resolvable:$true] %s60
      %66 = dma.hbm_to_vmem [thread:$0]  %s59, 1024, %s61, [#allocation9], 128, 128, 8
    $region17: #{tpu_custom_call.1} parent=1 // pred_fallthru
      _
    // Predicated region
    $region18: #{tpu_custom_call.1} parent=1 // pred_check
      _
    $region19: #{tpu_custom_call.1} parent=1 // pred_check_branch
      %68 = sbr.rel (0) target = $region21
    $region20: #{tpu_custom_call.1} parent=1 // pred_region
      %70 = vsyncadd [#allocation9], 0
      %s72 = sshll.u32 %s4, 4
      %s73 = int_to_ptr.hbm [resolvable:$true] %s72
      %s74 = sshll.u32 [#allocation10], 4
      %s75 = int_to_ptr.vmem [resolvable:$true] %s74
      %77 = dma.hbm_to_vmem [thread:$0]  %s73, 32, %s75, [#allocation9]
    $region21: #{tpu_custom_call.1} parent=1 // pred_fallthru
      _
    // Predicated region
    $region22: #{tpu_custom_call.1} parent=1 // pred_check
      _
    $region23: #{tpu_custom_call.1} parent=1 // pred_check_branch
      %79 = sbr.rel (0) target = $region25
    $region24: #{tpu_custom_call.1} parent=1 // pred_region
      _
    $region25: #{tpu_custom_call.1} parent=1 // pred_fallthru
      _
    // Predicated region
    $region26: #{tpu_custom_call.1} parent=1 // pred_check
      _
    $region27: #{tpu_custom_call.1} parent=1 // pred_check_branch
      %81 = sbr.rel (0) target = $region29
    $region28: #{tpu_custom_call.1} parent=1 // pred_region
      %83 = dma.done [#allocation3], 512
    $region29: #{tpu_custom_call.1} parent=1 // pred_fallthru
      _
    // Predicated region
    $region30: #{tpu_custom_call.1} parent=1 // pred_check
      _
    $region31: #{tpu_custom_call.1} parent=1 // pred_check_branch
      %85 = sbr.rel (0) target = $region33
    $region32: #{tpu_custom_call.1} parent=1 // pred_region
      %87 = dma.done [#allocation6], 3072
    $region33: #{tpu_custom_call.1} parent=1 // pred_fallthru
      _
    // Predicated region
    $region34: #{tpu_custom_call.1} parent=1 // pred_check
      _
    $region35: #{tpu_custom_call.1} parent=1 // pred_check_branch
      %89 = sbr.rel (0) target = $region37
    $region36: #{tpu_custom_call.1} parent=1 // pred_region
      %91 = dma.done [#allocation6], 6144
    $region37: #{tpu_custom_call.1} parent=1 // pred_fallthru
      _
    // Predicated region
    $region38: #{tpu_custom_call.1} parent=1 // pred_check
      _
    $region39: #{tpu_custom_call.1} parent=1 // pred_check_branch
      %93 = sbr.rel (0) target = $region41
    $region40: #{tpu_custom_call.1} parent=1 // pred_region
      %95 = dma.done [#allocation9], 1024
    $region41: #{tpu_custom_call.1} parent=1 // pred_fallthru
      _
    // Predicated region
    $region42: #{tpu_custom_call.1} parent=1 // pred_check
      _
    $region43: #{tpu_custom_call.1} parent=1 // pred_check_branch
      %97 = sbr.rel (0) target = $region45
    $region44: #{tpu_custom_call.1} parent=1 // pred_region
      %99 = dma.done [#allocation9], 32
    $region45: #{tpu_custom_call.1} parent=1 // pred_fallthru
      _
    %v100 = vld [vmem:[#allocation2] sm:$0xff]
    %v101 = vld [vmem:[#allocation2 + $0x8] sm:$0xff]
    %v102 = vld [vmem:[#allocation2 + $0x10] sm:$0xff]
    %v103 = vld [vmem:[#allocation2 + $0x18] sm:$0xff]
    %v104 = vld [vmem:[#allocation10] sm:$0x1]
    %v105 = vld [vmem:[#allocation10 + $0x1] sm:$0x1]
    %v106 = vld [vmem:[%s5] sm:$0x1]
    %v107 = vld [vmem:[%s5 + $0x1] sm:$0x1]
    %v108 = vld [vmem:[%s5 + $0x2] sm:$0x1]
    %v109 = vlaneseq
    %v110 = vshrl.u32 %v109, 7
    %v111 = vadd.s32 %v110, 8
    %v112 = vadd.s32 %v110, 16
    %v113 = vadd.s32 %v110, 24
    %vm114 = vcmp.lt.s32.totalorder %v110, 0
    %v115 = vsub.s32 0, %v110
    %v116 = vsel %vm114, %v115, %v110
    %v117 = vshrl.u32 %v116, 4
    %v118 = vand.u32 %v116, 15
    %v119 = vsub.s32 0, %v118
    %v120 = vsel %vm114, %v119, %v118
    %vm121 = vcmp.lt.s32.totalorder %v111, 0
    %v122 = vsub.s32 0, %v111
    %v123 = vsel %vm121, %v122, %v111
    %v124 = vshrl.u32 %v123, 4
    %v125 = vand.u32 %v123, 15
    %v126 = vsub.s32 0, %v125
    %v127 = vsel %vm121, %v126, %v125
    %vm128 = vcmp.lt.s32.totalorder %v112, 0
    %v129 = vsub.s32 0, %v112
    %v130 = vsel %vm128, %v129, %v112
    %v131 = vshrl.u32 %v130, 4
    %v132 = vand.u32 %v130, 15
    %v133 = vsub.s32 0, %v132
    %v134 = vsel %vm128, %v133, %v132
    %vm135 = vcmp.lt.s32.totalorder %v113, 0
    %v136 = vsub.s32 0, %v113
    %v137 = vsel %vm135, %v136, %v113
    %v138 = vshrl.u32 %v137, 4
    %v139 = vand.u32 %v137, 15
    %v140 = vsub.s32 0, %v139
    %v141 = vsel %vm135, %v140, %v139
    %vm142 = vcmp.ne.s32.totalorder %v120, 0
    %vm143 = vcmp.ne.s32.totalorder %v127, 0
    %vm144 = vcmp.ne.s32.totalorder %v134, 0
    %vm145 = vcmp.ne.s32.totalorder %v141, 0
    %vm146 = vcmp.lt.s32.totalorder %v120, 0
    %vm147 = vcmp.lt.s32.totalorder %v127, 0
    %vm148 = vcmp.lt.s32.totalorder %v134, 0
    %vm149 = vcmp.lt.s32.totalorder %v141, 0
    %vm150 = vmand %vm146, %vm142
    %vm151 = vmand %vm147, %vm143
    %vm152 = vmand %vm148, %vm144
    %vm153 = vmand %vm149, %vm145
    %v154 = vadd.s32 %v120, 16
    %v155 = vadd.s32 %v127, 16
    %v156 = vadd.s32 %v134, 16
    %v157 = vadd.s32 %v141, 16
    %v158 = vsel %vm150, %v154, %v120
    %v159 = vsel %vm151, %v155, %v127
    %v160 = vsel %vm152, %v156, %v134
    %v161 = vsel %vm153, %v157, %v141
    %vm162 = vcmp.ne.s32.totalorder %v158, 0
    %vm163 = vcmp.ne.s32.totalorder %v159, 0
    %vm164 = vcmp.ne.s32.totalorder %v160, 0
    %vm165 = vcmp.ne.s32.totalorder %v161, 0
    %vm166 = vcmp.ne.s32.totalorder %v158, 15
    %vm167 = vcmp.ne.s32.totalorder %v159, 15
    %vm168 = vcmp.ne.s32.totalorder %v160, 15
    %vm169 = vcmp.ne.s32.totalorder %v161, 15
    %v170 = vperm.slane %v104, 0
    %v171 = vmul.f32 %v100, %v170
    %v172 = vmul.f32 %v101, %v170
    %v173 = vmul.f32 %v102, %v170
    %v174 = vmul.f32 %v103, %v170
    %v175 = vperm.slane %v105, 0
    %v176 = vadd.f32 %v171, %v175
    %v177 = vadd.f32 %v172, %v175
    %v178 = vadd.f32 %v173, %v175
    %v179 = vadd.f32 %v174, %v175
    %v180 = vmax.f32 %v176, 0.0
    %v181 = vmax.f32 %v177, 0.0
    %v182 = vmax.f32 %v178, 0.0
    %v183 = vmax.f32 %v179, 0.0
    %v184 = vld [vmem:[#allocation5] sm:$0xff]
    %v185 = vld [vmem:[#allocation5 + $0x8] sm:$0xff]
    %v186 = vld [vmem:[#allocation5 + $0x10] sm:$0xff]
    %v187 = vld [vmem:[#allocation5 + $0x18] sm:$0xff]
    %v188 = vld [vmem:[#allocation5 + $0x20] sm:$0xff]
    %v189 = vld [vmem:[#allocation5 + $0x28] sm:$0xff]
    %v190 = vld [vmem:[#allocation5 + $0x30] sm:$0xff]
    %v191 = vld [vmem:[#allocation5 + $0x38] sm:$0xff]
    %v192 = vld [vmem:[#allocation5 + $0x40] sm:$0xff]
    %v193 = vld [vmem:[#allocation5 + $0x48] sm:$0xff]
    %v194 = vld [vmem:[#allocation5 + $0x50] sm:$0xff]
    %v195 = vld [vmem:[#allocation5 + $0x58] sm:$0xff]
    %v196 = vld [vmem:[#allocation5 + $0x60] sm:$0xff]
    %v197 = vld [vmem:[#allocation5 + $0x68] sm:$0xff]
    %v198 = vld [vmem:[#allocation5 + $0x70] sm:$0xff]
    %v199 = vld [vmem:[#allocation5 + $0x78] sm:$0xff]
    %v200 = vld [vmem:[#allocation5 + $0x80] sm:$0xff]
    %v201 = vld [vmem:[#allocation5 + $0x88] sm:$0xff]
    %v202 = vld [vmem:[#allocation5 + $0x90] sm:$0xff]
    %v203 = vld [vmem:[#allocation5 + $0x98] sm:$0xff]
    %v204 = vld [vmem:[#allocation5 + $0xa0] sm:$0xff]
    %v205 = vld [vmem:[#allocation5 + $0xa8] sm:$0xff]
    %v206 = vld [vmem:[#allocation5 + $0xb0] sm:$0xff]
    %v207 = vld [vmem:[#allocation5 + $0xb8] sm:$0xff]
    %vm208 = vcmask 523264
    %v210 = vsel %vm208, %v180, 0
    %v213 = vsel %vm208, %v181, 0
    %v216 = vsel %vm208, %v182, 0
    %v219 = vsel %vm208, %v183, 0
    %221 = vmatpush.msra.mxu0 0.0
    %222 = vmatpush.msra.mxu0 0.0
    %223 = vmatpush.msra.mxu0 0.0
    %224 = vmatpush.msra.mxu0 0.0
    %225 = vmatpush.msra.mxu0 0.0
    %226 = vmatpush.msra.mxu0 0.0
    %227 = vmatpush.msra.mxu0 0.0
    %228 = vmatpush.msra.mxu0 0.0
    %229 = vmatpush.msra.mxu0 %v205
    %230 = vmatpush.msra.mxu0 %v202
    %231 = vmatpush.msra.mxu0 %v199
    %232 = vmatpush.msra.mxu0 %v196
    %233 = vmatpush.msra.mxu0 %v193
    %234 = vmatpush.msra.mxu0 %v190
    %235 = vmatpush.msra.mxu0 %v187
    %236 = vmatpush.msra.mxu0 %v184
    %237 = vmatmul.f32.gmra.mxu0 %v210
    %v238 = vpop.f32.mrf.mxu0
    %v239 = vadd.f32 0.0, %v238
    %240 = vmatmul.f32.gmra.mxu0 %v213
    %v241 = vpop.f32.mrf.mxu0
    %v242 = vadd.f32 0.0, %v241
    %243 = vmatmul.f32.gmra.mxu0 %v216
    %v244 = vpop.f32.mrf.mxu0
    %v245 = vadd.f32 0.0, %v244
    %246 = vmatmul.f32.gmra.mxu0 %v219
    %v247 = vpop.f32.mrf.mxu0
    %v248 = vadd.f32 0.0, %v247
    %249 = vdwg.mxu0
    %250 = vmatpush.msra.mxu0 0.0
    %251 = vmatpush.msra.mxu0 0.0
    %252 = vmatpush.msra.mxu0 0.0
    %253 = vmatpush.msra.mxu0 0.0
    %254 = vmatpush.msra.mxu0 0.0
    %255 = vmatpush.msra.mxu0 0.0
    %256 = vmatpush.msra.mxu0 0.0
    %257 = vmatpush.msra.mxu0 0.0
    %258 = vmatpush.msra.mxu0 %v206
    %259 = vmatpush.msra.mxu0 %v203
    %260 = vmatpush.msra.mxu0 %v200
    %261 = vmatpush.msra.mxu0 %v197
    %262 = vmatpush.msra.mxu0 %v194
    %263 = vmatpush.msra.mxu0 %v191
    %264 = vmatpush.msra.mxu0 %v188
    %265 = vmatpush.msra.mxu0 %v185
    %266 = vmatmul.f32.gmra.mxu0 %v210
    %v267 = vpop.f32.mrf.mxu0
    %v268 = vadd.f32 0.0, %v267
    %269 = vmatmul.f32.gmra.mxu0 %v213
    %v270 = vpop.f32.mrf.mxu0
    %v271 = vadd.f32 0.0, %v270
    %272 = vmatmul.f32.gmra.mxu0 %v216
    %v273 = vpop.f32.mrf.mxu0
    %v274 = vadd.f32 0.0, %v273
    %275 = vmatmul.f32.gmra.mxu0 %v219
    %v276 = vpop.f32.mrf.mxu0
    %v277 = vadd.f32 0.0, %v276
    %278 = vdwg.mxu0
    %279 = vmatpush.msra.mxu0 0.0
    %280 = vmatpush.msra.mxu0 0.0
    %281 = vmatpush.msra.mxu0 0.0
    %282 = vmatpush.msra.mxu0 0.0
    %283 = vmatpush.msra.mxu0 0.0
    %284 = vmatpush.msra.mxu0 0.0
    %285 = vmatpush.msra.mxu0 0.0
    %286 = vmatpush.msra.mxu0 0.0
    %287 = vmatpush.msra.mxu0 %v207
    %288 = vmatpush.msra.mxu0 %v204
    %289 = vmatpush.msra.mxu0 %v201
    %290 = vmatpush.msra.mxu0 %v198
    %291 = vmatpush.msra.mxu0 %v195
    %292 = vmatpush.msra.mxu0 %v192
    %293 = vmatpush.msra.mxu0 %v189
    %294 = vmatpush.msra.mxu0 %v186
    %295 = vmatmul.f32.gmra.mxu0 %v210
    %v296 = vpop.f32.mrf.mxu0
    %v297 = vadd.f32 0.0, %v296
    %298 = vmatmul.f32.gmra.mxu0 %v213
    %v299 = vpop.f32.mrf.mxu0
    %v300 = vadd.f32 0.0, %v299
    %301 = vmatmul.f32.gmra.mxu0 %v216
    %v302 = vpop.f32.mrf.mxu0
    %v303 = vadd.f32 0.0, %v302
    %304 = vmatmul.f32.gmra.mxu0 %v219
    %v305 = vpop.f32.mrf.mxu0
    %v306 = vadd.f32 0.0, %v305
    %307 = vdwg.mxu0
    %v308 = vrot.slane %v239, 7
    %v309 = vrot.slane %v242, 7
    %v310 = vrot.slane %v245, 7
    %v311 = vrot.slane %v248, 7
    %vm312 = vcmp.lt.s32.totalorder %v110, 1
    %v313 = vsel %vm312, %v310, %v311
    %v314 = vsel %vm312, %v309, %v310
    %v315 = vsel %vm312, %v308, %v309
    %v316 = vsel %vm312, %v311, %v308
    %v317 = vsel %vm162, 1, 0
    %v318 = vsel %vm163, 1, 0
    %v319 = vsel %vm164, 1, 0
    %v320 = vsel %vm165, 1, 0
    %vm321 = vcmp.eq.s32.totalorder %v317, 1
    %vm322 = vcmp.eq.s32.totalorder %v318, 1
    %vm323 = vcmp.eq.s32.totalorder %v319, 1
    %vm324 = vcmp.eq.s32.totalorder %v320, 1
    %v325 = vsel %vm321, %v316, 0.0
    %v326 = vsel %vm322, %v315, 0.0
    %v327 = vsel %vm323, %v314, 0.0
    %v328 = vsel %vm324, %v313, 0.0
    %v329 = vrot.slane %v297, 1
    %v330 = vrot.slane %v300, 1
    %v331 = vrot.slane %v303, 1
    %v332 = vrot.slane %v306, 1
    %vm333 = vcmp.lt.s32.totalorder %v110, 7
    %v334 = vsel %vm333, %v331, %v332
    %v335 = vsel %vm333, %v330, %v331
    %v336 = vsel %vm333, %v329, %v330
    %v337 = vsel %vm333, %v332, %v329
    %v338 = vsel %vm166, 1, 0
    %v339 = vsel %vm167, 1, 0
    %v340 = vsel %vm168, 1, 0
    %v341 = vsel %vm169, 1, 0
    %vm342 = vcmp.eq.s32.totalorder %v338, 1
    %vm343 = vcmp.eq.s32.totalorder %v339, 1
    %vm344 = vcmp.eq.s32.totalorder %v340, 1
    %vm345 = vcmp.eq.s32.totalorder %v341, 1
    %v346 = vsel %vm342, %v336, 0.0
    %v347 = vsel %vm343, %v335, 0.0
    %v348 = vsel %vm344, %v334, 0.0
    %v349 = vsel %vm345, %v337, 0.0
    %v350 = vadd.f32 %v325, %v268
    %v351 = vadd.f32 %v326, %v271
    %v352 = vadd.f32 %v327, %v274
    %v353 = vadd.f32 %v328, %v277
    %v354 = vadd.f32 %v350, %v346
    %v355 = vadd.f32 %v351, %v347
    %v356 = vadd.f32 %v352, %v348
    %v357 = vadd.f32 %v353, %v349
    %v358 = vperm.slane %v106, 0
    %v359 = vmul.f32 %v354, %v358
    %v360 = vmul.f32 %v355, %v358
    %v361 = vmul.f32 %v356, %v358
    %v362 = vmul.f32 %v357, %v358
    %v363 = vperm.slane %v107, 0
    %v364 = vadd.f32 %v359, %v363
    %v365 = vadd.f32 %v360, %v363
    %v366 = vadd.f32 %v361, %v363
    %v367 = vadd.f32 %v362, %v363
    %v368 = vmax.f32 %v364, 0.0
    %v369 = vmax.f32 %v365, 0.0
    %v370 = vmax.f32 %v366, 0.0
    %v371 = vmax.f32 %v367, 0.0
    %v372 = vld [vmem:[#allocation7] sm:$0xff]
    %v373 = vld [vmem:[#allocation7 + $0x8] sm:$0xff]
    %v374 = vld [vmem:[#allocation7 + $0x10] sm:$0xff]
    %v375 = vld [vmem:[#allocation7 + $0x18] sm:$0xff]
    %v376 = vld [vmem:[#allocation7 + $0x20] sm:$0xff]
    %v377 = vld [vmem:[#allocation7 + $0x28] sm:$0xff]
    %v378 = vld [vmem:[#allocation7 + $0x30] sm:$0xff]
    %v379 = vld [vmem:[#allocation7 + $0x38] sm:$0xff]
    %v380 = vld [vmem:[#allocation7 + $0x40] sm:$0xff]
    %v381 = vld [vmem:[#allocation7 + $0x48] sm:$0xff]
    %v382 = vld [vmem:[#allocation7 + $0x50] sm:$0xff]
    %v383 = vld [vmem:[#allocation7 + $0x58] sm:$0xff]
    %v384 = vld [vmem:[#allocation7 + $0x60] sm:$0xff]
    %v385 = vld [vmem:[#allocation7 + $0x68] sm:$0xff]
    %v386 = vld [vmem:[#allocation7 + $0x70] sm:$0xff]
    %v387 = vld [vmem:[#allocation7 + $0x78] sm:$0xff]
    %v388 = vld [vmem:[#allocation7 + $0x80] sm:$0xff]
    %v389 = vld [vmem:[#allocation7 + $0x88] sm:$0xff]
    %v390 = vld [vmem:[#allocation7 + $0x90] sm:$0xff]
    %v391 = vld [vmem:[#allocation7 + $0x98] sm:$0xff]
    %v392 = vld [vmem:[#allocation7 + $0xa0] sm:$0xff]
    %v393 = vld [vmem:[#allocation7 + $0xa8] sm:$0xff]
    %v394 = vld [vmem:[#allocation7 + $0xb0] sm:$0xff]
    %v395 = vld [vmem:[#allocation7 + $0xb8] sm:$0xff]
    %v396 = vld [vmem:[#allocation7 + $0xc0] sm:$0xff]
    %v397 = vld [vmem:[#allocation7 + $0xc8] sm:$0xff]
    %v398 = vld [vmem:[#allocation7 + $0xd0] sm:$0xff]
    %v399 = vld [vmem:[#allocation7 + $0xd8] sm:$0xff]
    %v400 = vld [vmem:[#allocation7 + $0xe0] sm:$0xff]
    %v401 = vld [vmem:[#allocation7 + $0xe8] sm:$0xff]
    %v402 = vld [vmem:[#allocation7 + $0xf0] sm:$0xff]
    %v403 = vld [vmem:[#allocation7 + $0xf8] sm:$0xff]
    %v404 = vld [vmem:[#allocation7 + $0x100] sm:$0xff]
    %v405 = vld [vmem:[#allocation7 + $0x108] sm:$0xff]
    %v406 = vld [vmem:[#allocation7 + $0x110] sm:$0xff]
    %v407 = vld [vmem:[#allocation7 + $0x118] sm:$0xff]
    %v408 = vld [vmem:[#allocation7 + $0x120] sm:$0xff]
    %v409 = vld [vmem:[#allocation7 + $0x128] sm:$0xff]
    %v410 = vld [vmem:[#allocation7 + $0x130] sm:$0xff]
    %v411 = vld [vmem:[#allocation7 + $0x138] sm:$0xff]
    %v412 = vld [vmem:[#allocation7 + $0x140] sm:$0xff]
    %v413 = vld [vmem:[#allocation7 + $0x148] sm:$0xff]
    %v414 = vld [vmem:[#allocation7 + $0x150] sm:$0xff]
    %v415 = vld [vmem:[#allocation7 + $0x158] sm:$0xff]
    %v416 = vld [vmem:[#allocation7 + $0x160] sm:$0xff]
    %v417 = vld [vmem:[#allocation7 + $0x168] sm:$0xff]
    %v418 = vld [vmem:[#allocation7 + $0x170] sm:$0xff]
    %v419 = vld [vmem:[#allocation7 + $0x178] sm:$0xff]
    %420 = vmatpush.msra.mxu0 %v417
    %421 = vmatpush.msra.mxu0 %v414
    %422 = vmatpush.msra.mxu0 %v411
    %423 = vmatpush.msra.mxu0 %v408
    %424 = vmatpush.msra.mxu0 %v405
    %425 = vmatpush.msra.mxu0 %v402
    %426 = vmatpush.msra.mxu0 %v399
    %427 = vmatpush.msra.mxu0 %v396
    %428 = vmatpush.msra.mxu0 %v393
    %429 = vmatpush.msra.mxu0 %v390
    %430 = vmatpush.msra.mxu0 %v387
    %431 = vmatpush.msra.mxu0 %v384
    %432 = vmatpush.msra.mxu0 %v381
    %433 = vmatpush.msra.mxu0 %v378
    %434 = vmatpush.msra.mxu0 %v375
    %435 = vmatpush.msra.mxu0 %v372
    %436 = vmatmul.f32.gmra.mxu0 %v368
    %v437 = vpop.f32.mrf.mxu0
    %v438 = vadd.f32 0.0, %v437
    %439 = vmatmul.f32.gmra.mxu0 %v369
    %v440 = vpop.f32.mrf.mxu0
    %v441 = vadd.f32 0.0, %v440
    %442 = vmatmul.f32.gmra.mxu0 %v370
    %v443 = vpop.f32.mrf.mxu0
    %v444 = vadd.f32 0.0, %v443
    %445 = vmatmul.f32.gmra.mxu0 %v371
    %v446 = vpop.f32.mrf.mxu0
    %v447 = vadd.f32 0.0, %v446
    %448 = vdwg.mxu0
    %449 = vmatpush.msra.mxu0 %v418
    %450 = vmatpush.msra.mxu0 %v415
    %451 = vmatpush.msra.mxu0 %v412
    %452 = vmatpush.msra.mxu0 %v409
    %453 = vmatpush.msra.mxu0 %v406
    %454 = vmatpush.msra.mxu0 %v403
    %455 = vmatpush.msra.mxu0 %v400
    %456 = vmatpush.msra.mxu0 %v397
    %457 = vmatpush.msra.mxu0 %v394
    %458 = vmatpush.msra.mxu0 %v391
    %459 = vmatpush.msra.mxu0 %v388
    %460 = vmatpush.msra.mxu0 %v385
    %461 = vmatpush.msra.mxu0 %v382
    %462 = vmatpush.msra.mxu0 %v379
    %463 = vmatpush.msra.mxu0 %v376
    %464 = vmatpush.msra.mxu0 %v373
    %465 = vmatmul.f32.gmra.mxu0 %v368
    %v466 = vpop.f32.mrf.mxu0
    %v467 = vadd.f32 0.0, %v466
    %468 = vmatmul.f32.gmra.mxu0 %v369
    %v469 = vpop.f32.mrf.mxu0
    %v470 = vadd.f32 0.0, %v469
    %471 = vmatmul.f32.gmra.mxu0 %v370
    %v472 = vpop.f32.mrf.mxu0
    %v473 = vadd.f32 0.0, %v472
    %474 = vmatmul.f32.gmra.mxu0 %v371
    %v475 = vpop.f32.mrf.mxu0
    %v476 = vadd.f32 0.0, %v475
    %477 = vdwg.mxu0
    %478 = vmatpush.msra.mxu0 %v419
    %479 = vmatpush.msra.mxu0 %v416
    %480 = vmatpush.msra.mxu0 %v413
    %481 = vmatpush.msra.mxu0 %v410
    %482 = vmatpush.msra.mxu0 %v407
    %483 = vmatpush.msra.mxu0 %v404
    %484 = vmatpush.msra.mxu0 %v401
    %485 = vmatpush.msra.mxu0 %v398
    %486 = vmatpush.msra.mxu0 %v395
    %487 = vmatpush.msra.mxu0 %v392
    %488 = vmatpush.msra.mxu0 %v389
    %489 = vmatpush.msra.mxu0 %v386
    %490 = vmatpush.msra.mxu0 %v383
    %491 = vmatpush.msra.mxu0 %v380
    %492 = vmatpush.msra.mxu0 %v377
    %493 = vmatpush.msra.mxu0 %v374
    %494 = vmatmul.f32.gmra.mxu0 %v368
    %v495 = vpop.f32.mrf.mxu0
    %v496 = vadd.f32 0.0, %v495
    %497 = vmatmul.f32.gmra.mxu0 %v369
    %v498 = vpop.f32.mrf.mxu0
    %v499 = vadd.f32 0.0, %v498
    %500 = vmatmul.f32.gmra.mxu0 %v370
    %v501 = vpop.f32.mrf.mxu0
    %v502 = vadd.f32 0.0, %v501
    %503 = vmatmul.f32.gmra.mxu0 %v371
    %v504 = vpop.f32.mrf.mxu0
    %v505 = vadd.f32 0.0, %v504
    %506 = vdwg.mxu0
    %v507 = vrot.slane %v438, 7
    %v508 = vrot.slane %v441, 7
    %v509 = vrot.slane %v444, 7
    %v510 = vrot.slane %v447, 7
    %v511 = vsel %vm312, %v509, %v510
    %v512 = vsel %vm312, %v508, %v509
    %v513 = vsel %vm312, %v507, %v508
    %v514 = vsel %vm312, %v510, %v507
    %v515 = vsel %vm321, %v514, 0.0
    %v516 = vsel %vm322, %v513, 0.0
    %v517 = vsel %vm323, %v512, 0.0
    %v518 = vsel %vm324, %v511, 0.0
    %v519 = vrot.slane %v496, 1
    %v520 = vrot.slane %v499, 1
    %v521 = vrot.slane %v502, 1
    %v522 = vrot.slane %v505, 1
    %v523 = vsel %vm333, %v521, %v522
    %v524 = vsel %vm333, %v520, %v521
    %v525 = vsel %vm333, %v519, %v520
    %v526 = vsel %vm333, %v522, %v519
    %v527 = vsel %vm342, %v525, 0.0
    %v528 = vsel %vm343, %v524, 0.0
    %v529 = vsel %vm344, %v523, 0.0
    %v530 = vsel %vm345, %v526, 0.0
    %v531 = vadd.f32 %v515, %v467
    %v532 = vadd.f32 %v516, %v470
    %v533 = vadd.f32 %v517, %v473
    %v534 = vadd.f32 %v518, %v476
    %v535 = vadd.f32 %v531, %v527
    %v536 = vadd.f32 %v532, %v528
    %v537 = vadd.f32 %v533, %v529
    %v538 = vadd.f32 %v534, %v530
    %v539 = vld [vmem:[#allocation8] sm:$0xff]
    %v540 = vld [vmem:[#allocation8 + $0x8] sm:$0xff]
    %v541 = vld [vmem:[#allocation8 + $0x10] sm:$0xff]
    %v542 = vld [vmem:[#allocation8 + $0x18] sm:$0xff]
    %v543 = vld [vmem:[#allocation8 + $0x20] sm:$0xff]
    %v544 = vld [vmem:[#allocation8 + $0x28] sm:$0xff]
    %v545 = vld [vmem:[#allocation8 + $0x30] sm:$0xff]
    %v546 = vld [vmem:[#allocation8 + $0x38] sm:$0xff]
    %v548 = vsel %vm208, %v100, 0
    %v551 = vsel %vm208, %v101, 0
    %v554 = vsel %vm208, %v102, 0
    %v557 = vsel %vm208, %v103, 0
    %559 = vmatpush.msra.mxu0 0.0
    %560 = vmatpush.msra.mxu0 0.0
    %561 = vmatpush.msra.mxu0 0.0
    %562 = vmatpush.msra.mxu0 0.0
    %563 = vmatpush.msra.mxu0 0.0
    %564 = vmatpush.msra.mxu0 0.0
    %565 = vmatpush.msra.mxu0 0.0
    %566 = vmatpush.msra.mxu0 0.0
    %567 = vmatpush.msra.mxu0 %v546
    %568 = vmatpush.msra.mxu0 %v545
    %569 = vmatpush.msra.mxu0 %v544
    %570 = vmatpush.msra.mxu0 %v543
    %571 = vmatpush.msra.mxu0 %v542
    %572 = vmatpush.msra.mxu0 %v541
    %573 = vmatpush.msra.mxu0 %v540
    %574 = vmatpush.msra.mxu0 %v539
    %575 = vmatmul.f32.gmra.mxu0 %v548
    %v576 = vpop.f32.mrf.mxu0
    %v577 = vadd.f32 0.0, %v576
    %578 = vmatmul.f32.gmra.mxu0 %v551
    %v579 = vpop.f32.mrf.mxu0
    %v580 = vadd.f32 0.0, %v579
    %581 = vmatmul.f32.gmra.mxu0 %v554
    %v582 = vpop.f32.mrf.mxu0
    %v583 = vadd.f32 0.0, %v582
    %584 = vmatmul.f32.gmra.mxu0 %v557
    %v585 = vpop.f32.mrf.mxu0
    %v586 = vadd.f32 0.0, %v585
    %587 = vdwg.mxu0
    %v588 = vadd.f32 %v535, %v577
    %v589 = vadd.f32 %v536, %v580
    %v590 = vadd.f32 %v537, %v583
    %v591 = vadd.f32 %v538, %v586
    %v592 = vperm.slane %v108, 0
    %v593 = vadd.f32 %v588, %v592
    %v594 = vadd.f32 %v589, %v592
    %v595 = vadd.f32 %v590, %v592
    %v596 = vadd.f32 %v591, %v592
    %597 = vst [vmem:[#allocation11] sm:$0xff] %v593
    %598 = vst [vmem:[#allocation11 + $0x8] sm:$0xff] %v594
    %599 = vst [vmem:[#allocation11 + $0x10] sm:$0xff] %v595
    %600 = vst [vmem:[#allocation11 + $0x18] sm:$0xff] %v596
    // Predicated region
    $region46: #{tpu_custom_call.1} parent=1 // pred_check
      _
    $region47: #{tpu_custom_call.1} parent=1 // pred_check_branch
      %602 = sbr.rel (0) target = $region49
    $region48: #{tpu_custom_call.1} parent=1 // pred_region
      %604 = vsyncadd [#allocation4], 0
      %s605 = sshll.u32 [#allocation11], 4
      %s606 = int_to_ptr.vmem [resolvable:$true] %s605
      %s607 = sshll.u32 %s6, 4
      %s608 = int_to_ptr.hbm [resolvable:$true] %s607
      %613 = dma.vmem_to_hbm [thread:$0]  %s606, 512, %s608, [#allocation4], 128, 128, 8
    $region49: #{tpu_custom_call.1} parent=1 // pred_fallthru
      _
    // Predicated region
    $region50: #{tpu_custom_call.1} parent=1 // pred_check
      _
    $region51: #{tpu_custom_call.1} parent=1 // pred_check_branch
      %615 = sbr.rel (0) target = $region53
    $region52: #{tpu_custom_call.1} parent=1 // pred_region
      %617 = dma.done [#allocation4], 512
    $region53: #{tpu_custom_call.1} parent=1 // pred_fallthru
      _
    %618 = vsyncpa [#allocation3], 1
    %619 = vsyncpa [#allocation6], 1
    %620 = vsyncpa [#allocation9], 1
    %621 = vsyncpa [#allocation4], 1

</llo_original>
